<compile_context>
chip_gen: v6e
topology: v6e:2x2x1
jax: 0.10.0
libtpu: 0.0.40
codegen_flags: <defaults>
</compile_context>

<pallas_src>
import jax
import jax.numpy as jnp
from jax.experimental import pallas as pl
from jax.experimental.pallas import tpu as pltpu


def _h_sigmoid_kernel(x_ref, o_ref):
    x = x_ref[...]
    if x.dtype.itemsize < 4:            # bf16/f16/fp8: compute in f32 (free; ~1-ulp fix)
        x = x.astype(jnp.float32)
    o_ref[...] = (jnp.clip(x + 3.0, 0.0, 6.0) * (1.0 / 6.0)).astype(o_ref.dtype)


_LANE = 128
_COL_CANDIDATES = (4096, 2048, 1024, 512, 256, 128)   # lane-dense widths, widest first
_SINGLE_BLOCK_MAX_BYTES = 1 << 20      # above this, always use >= 2 grid steps
_SINGLE_ROW_MAX_BYTES = 64 << 10       # (1, n) single-row blocks waste 8x sublanes in VMEM


def _chip_config():
    """Per-generation block-size / scoped-VMEM / core-split choices."""
    try:
        kind = jax.devices()[0].device_kind.lower()
    except Exception:
        kind = ""
    if "v7" in kind:
        # 64 MiB VMEM per TC, HBM bandwidth is per-TC -> split grid across both TCs.
        return {"target_block_bytes": 8 << 20, "vmem_limit_bytes": 40 << 20,
                "core_parallel": True}
    if "v6" in kind:
        # 128 MiB VMEM: bigger blocks shave the fixed ~0.35 us/step pipeline overhead.
        return {"target_block_bytes": 8 << 20, "vmem_limit_bytes": 48 << 20,
                "core_parallel": False}
    # v5e (and default): ~820 GB/s HBM, 16 MiB default scoped VMEM -> 4 MiB blocks.
    return {"target_block_bytes": 4 << 20, "vmem_limit_bytes": 20 << 20,
            "core_parallel": False}


def _dimension_semantics(nblocks, core_parallel):
    if nblocks <= 1:
        return (pltpu.ARBITRARY,)
    if core_parallel and hasattr(pltpu, "CORE_PARALLEL"):
        return (pltpu.CORE_PARALLEL,)
    return (pltpu.PARALLEL,)


def h_sigmoid(x):
    """Hard-sigmoid relu6(x+3)/6 applied elementwise. x: any shape, any float dtype."""
    orig_shape = x.shape
    dtype = x.dtype
    n = int(x.size)
    if n == 0:
        return x
    itemsize = jnp.dtype(dtype).itemsize
    total_bytes = n * itemsize
    cfg = _chip_config()
    flat = x.reshape(-1)               # free (contiguous bitcast)

    # ---- pad-free 2D factorization of the flat length ------------------------
    # 1) widest 128-multiple divisor (aligned case: wide unmasked vst stores)
    cols = next((c for c in _COL_CANDIDATES if n % c == 0), None)
    if cols is None:
        # 2) misaligned: widest divisor in [128, 4096]. The block spans the full
        #    lane dim (always legal); stores on the ragged lane tail are masked,
        #    but the tensor still makes exactly one HBM pass (no pad, no slice).
        cols = next((c for c in range(min(4096, n), _LANE - 1, -1) if n % c == 0), None)
    if cols is None:
        cols = n                       # tiny or near-prime length: one row

    if cols == n and total_bytes > _SINGLE_ROW_MAX_BYTES:
        # Pathological corner (large tensor whose length has no divisor in
        # [128, 4096]): run the 128-aligned bulk through the kernel and the
        # <128-element tail in plain jnp. Costs one extra HBM pass, but this
        # cannot occur for conv-shaped NCHW activations.
        n_bulk = (n // _LANE) * _LANE
        bulk = h_sigmoid(flat[:n_bulk])
        tail = (jnp.clip(flat[n_bulk:].astype(jnp.float32) + 3.0, 0.0, 6.0)
                * (1.0 / 6.0)).astype(dtype)
        return jnp.concatenate([bulk, tail]).reshape(orig_shape)

    rows = n // cols
    x2d = flat.reshape(rows, cols)     # free (contiguous bitcast)
    sub = max(8, 32 // itemsize)       # sublane quantum: 8 f32 / 16 bf16 / 32 int8

    # ---- tile selection -------------------------------------------------------
    if total_bytes <= _SINGLE_BLOCK_MAX_BYTES or rows <= sub:
        tile_rows, nblocks = rows, 1   # whole array = one block (always legal)
    else:
        # >= 2 steps so the pipeline overlaps and v7x can split across its 2 TCs.
        nblocks = max(2, pl.cdiv(total_bytes, cfg["target_block_bytes"]))
        if cfg["core_parallel"] and nblocks % 2:
            nblocks += 1               # even split across the two TensorCores
        tile_rows = min(rows, max(sub, pl.cdiv(pl.cdiv(rows, nblocks), sub) * sub))
        nblocks = pl.cdiv(rows, tile_rows)

    out2d = pl.pallas_call(
        _h_sigmoid_kernel,
        out_shape=jax.ShapeDtypeStruct((rows, cols), dtype),
        grid_spec=pltpu.PrefetchScalarGridSpec(
            num_scalar_prefetch=0,
            grid=(nblocks,),
            in_specs=[pl.BlockSpec((tile_rows, cols), lambda i: (i, 0))],
            out_specs=pl.BlockSpec((tile_rows, cols), lambda i: (i, 0)),
        ),
        compiler_params=pltpu.CompilerParams(
            dimension_semantics=_dimension_semantics(nblocks, cfg["core_parallel"]),
            vmem_limit_bytes=cfg["vmem_limit_bytes"],
        ),
        cost_estimate=pl.CostEstimate(
            flops=4 * n, transcendentals=0, bytes_accessed=2 * total_bytes),
    )(x2d)

    return out2d.reshape(orig_shape)


def h_sigmoid_ref(x):
    return jnp.clip(x + 3.0, 0.0, 6.0) / 6.0


if __name__ == "__main__":
    k1, k2, k3 = jax.random.split(jax.random.PRNGKey(0), 3)

    # Small NCHW input (128-aligned flat length -> lane-dense single-block path).
    x1 = jax.random.normal(k1, (2, 4, 16, 16), dtype=jnp.float32) * 4.0
    y1 = jax.block_until_ready(h_sigmoid(x1))
    assert y1.shape == x1.shape and y1.dtype == x1.dtype
    assert jnp.allclose(y1, h_sigmoid_ref(x1), atol=1e-6), "mismatch (aligned)"

    # Non-128-aligned flat length (315 elems) -> pad-free misaligned path.
    x2 = jax.random.normal(k2, (3, 5, 7, 3), dtype=jnp.float32) * 4.0
    y2 = jax.block_until_ready(h_sigmoid(x2))
    assert y2.shape == x2.shape and y2.dtype == x2.dtype
    assert jnp.allclose(y2, h_sigmoid_ref(x2), atol=1e-6), "mismatch (misaligned)"

    # 2 MiB aligned tensor -> multi-block pipelined grid (>=2 steps, TC split on v7x).
    x3 = jax.random.normal(k3, (2, 64, 64, 64), dtype=jnp.float32) * 4.0
    y3 = jax.block_until_ready(h_sigmoid(x3))
    assert jnp.allclose(y3, h_sigmoid_ref(x3), atol=1e-6), "mismatch (multi-block)"

    print("KERNEL_OK")
</pallas_src>

<mosaic_0001>
module attributes {stable_mosaic.version = 11 : i64} {
  func.func @_h_sigmoid_kernel(%arg0: i32, %arg1: memref<1x2048xf32, #tpu.memory_space<vmem>>, %arg2: memref<1x2048xf32, #tpu.memory_space<vmem>>) attributes {dimension_semantics = [#tpu.dimension_semantics<arbitrary>], iteration_bounds = array<i64: 1>, scalar_prefetch = 0 : i64, scratch_operands = 0 : i64, tpu.core_type = #tpu.core_type<tc>, window_params = [{transform_indices = @transform_0, window_bounds = array<i64: 1, 2048>}, {transform_indices = @transform_1, window_bounds = array<i64: 1, 2048>}]} {
    %c0 = arith.constant 0 : index
    %c0_0 = arith.constant 0 : index
    %0 = vector.load %arg1[%c0, %c0_0] : memref<1x2048xf32, #tpu.memory_space<vmem>>, vector<1x2048xf32>
    %cst = arith.constant 3.000000e+00 : f32
    %1 = vector.broadcast %cst : f32 to vector<1x2048xf32>
    %2 = arith.addf %0, %1 : vector<1x2048xf32>
    %cst_1 = arith.constant 0.000000e+00 : f32
    %cst_2 = arith.constant 6.000000e+00 : f32
    %3 = vector.broadcast %cst_1 : f32 to vector<1x2048xf32>
    %4 = arith.maximumf %3, %2 : vector<1x2048xf32>
    %5 = vector.broadcast %cst_2 : f32 to vector<1x2048xf32>
    %6 = arith.minimumf %5, %4 : vector<1x2048xf32>
    %cst_3 = arith.constant 0.166666672 : f32
    %7 = vector.broadcast %cst_3 : f32 to vector<1x2048xf32>
    %8 = arith.mulf %6, %7 : vector<1x2048xf32>
    %c0_4 = arith.constant 0 : index
    %c0_5 = arith.constant 0 : index
    %9 = vector.load %arg2[%c0_4, %c0_5] : memref<1x2048xf32, #tpu.memory_space<vmem>>, vector<1x2048xf32>
    tpu.vector_store %arg2[%c0_4, %c0_5], %8 {strides = array<i32>} : memref<1x2048xf32, #tpu.memory_space<vmem>>, vector<1x2048xf32>,
    return
  }
  func.func @transform_0(%arg0: i32) -> (i32, i32) {
    %c0_i32 = arith.constant 0 : i32
    %c0_i32_0 = arith.constant 0 : i32
    return %arg0, %c0_i32 : i32, i32
  }
  func.func @transform_1(%arg0: i32) -> (i32, i32) {
    %c0_i32 = arith.constant 0 : i32
    %c0_i32_0 = arith.constant 0 : i32
    return %arg0, %c0_i32 : i32, i32
  }
}

</mosaic_0001>

<llo_original>
// kernel: tpu_custom_call.1
$region0: #{tpu_custom_call.1}
  #allocation0 [shape = 'u32[]', space=smem, size = 0x4, offset = 0x4, fixed_abs, tag = 'smem constant byte address 0x4 - core index']
  #allocation1 [shape = 'u32[144,128]{1,0:T(1,128)}', space=vmem, size = 0x12000, scoped, tag = 'internal scratch']
  %s0 = inlined_call_operand.hbm [shape: f32[1,2048], index: 0, kind: input, shape index: {}]
  %s1 = inlined_call_operand.hbm [shape: f32[1,2048], index: 1, kind: output, shape index: {}]
  %s2 = sld [smem:[#allocation0]]
  $region18: #{tpu_custom_call.1} parent=0
    _
  %s4 = ssub.s32 1, %s2
  %s5 = scalar_select 0, %s4, %s2
  $region1: #{tpu_custom_call.1} parent=0
    #allocation2 [shape = 'u8[8192]{0}', space=vmem, size = 0x2000, scoped, tag = 'input window, operand 0, single buffered']
    #allocation3 [shape = 's32[1]{0}', space=sflag, size = 0x4, scoped, tag = 'scoped memory for tpu_custom_call.1']
    #allocation4 [shape = 's32[1]{0}', space=sflag, size = 0x4, scoped, tag = 'scoped memory for tpu_custom_call.1']
    #allocation5 [shape = 'u8[8192]{0}', space=vmem, size = 0x2000, scoped, tag = 'output window, operand 0, single buffered']
    %6 = vsyncpa [#allocation3], 0
    %7 = vsyncpa [#allocation4], 0
    // Predicated region
    $region2: #{tpu_custom_call.1} parent=1 // pred_check
      _
    $region3: #{tpu_custom_call.1} parent=1 // pred_check_branch
      %9 = sbr.rel (0) target = $region5
    $region4: #{tpu_custom_call.1} parent=1 // pred_region
      %s11 = ssub.s32 256, 256
      %12 = vsyncadd [#allocation3], %s11
      %s14 = sshll.u32 [#allocation2], 4
      %s15 = int_to_ptr.vmem [resolvable:$true] %s14
      %17 = dma.hbm_to_vmem [thread:$0]  %s0, 256, %s15, [#allocation3]
    $region5: #{tpu_custom_call.1} parent=1 // pred_fallthru
      _
    // Predicated region
    $region6: #{tpu_custom_call.1} parent=1 // pred_check
      _
    $region7: #{tpu_custom_call.1} parent=1 // pred_check_branch
      %19 = sbr.rel (0) target = $region9
    $region8: #{tpu_custom_call.1} parent=1 // pred_region
      %20 = dma.done [#allocation3], 256
    $region9: #{tpu_custom_call.1} parent=1 // pred_fallthru
      _
    %v21 = vld [vmem:[#allocation2] sm:$0xff]
    %v22 = vld [vmem:[#allocation2 + $0x8] sm:$0xff]
    %v23 = vadd.f32 %v21, 3.0
    %v24 = vadd.f32 %v22, 3.0
    %v25 = vmax.f32 %v23, 0.0
    %v26 = vmax.f32 %v24, 0.0
    %v27 = vmin.f32 %v25, 6.0
    %v28 = vmin.f32 %v26, 6.0
    %v29 = vmul.f32 %v27, 0.16666667
    %v30 = vmul.f32 %v28, 0.16666667
    %31 = vst [vmem:[#allocation5] sm:$0xff] %v29
    %32 = vst [vmem:[#allocation5 + $0x8] sm:$0xff] %v30
    // Predicated region
    $region10: #{tpu_custom_call.1} parent=1 // pred_check
      _
    $region11: #{tpu_custom_call.1} parent=1 // pred_check_branch
      %34 = sbr.rel (0) target = $region13
    $region12: #{tpu_custom_call.1} parent=1 // pred_region
      %s36 = ssub.s32 256, 256
      %37 = vsyncadd [#allocation4], %s36
      %s39 = sshll.u32 [#allocation5], 4
      %s40 = int_to_ptr.vmem [resolvable:$true] %s39
      %42 = dma.vmem_to_hbm [thread:$0]  %s40, 256, %s1, [#allocation4]
    $region13: #{tpu_custom_call.1} parent=1 // pred_fallthru
      _
    // Predicated region
    $region14: #{tpu_custom_call.1} parent=1 // pred_check
      _
    $region15: #{tpu_custom_call.1} parent=1 // pred_check_branch
      %44 = sbr.rel (0) target = $region17
    $region16: #{tpu_custom_call.1} parent=1 // pred_region
      %45 = dma.done [#allocation4], 256
    $region17: #{tpu_custom_call.1} parent=1 // pred_fallthru
      _
    %46 = vsyncpa [#allocation3], 1
    %47 = vsyncpa [#allocation4], 1

</llo_original>
